<compile_context>
chip_gen: v5e
topology: v5e:2x2
jax: 0.10.0
libtpu: 0.0.40
codegen_flags: <defaults>
</compile_context>

<pallas_src>
import functools
import math

import jax
import jax.numpy as jnp
from jax import lax
from jax.experimental import pallas as pl
from jax.experimental.pallas import tpu as pltpu


def _round_up(x, m):
    return ((x + m - 1) // m) * m


def _cdiv(a, b):
    return -(-a // b)


def _pad_to(a, shape):
    """Zero-pad `a` up to `shape`; no-op (no copy) if already that shape."""
    if tuple(a.shape) == tuple(shape):
        return a
    return jnp.pad(a, [(0, t - s) for s, t in zip(a.shape, shape)])


def _mlp_kernel(x_ref, w1_ref, b1_ref, w2_ref, b2_ref, o_ref, acc_ref, *, resident):
    # x_ref : (tm, Dp)
    # resident: w1_ref (nk, Dp, th) | b1_ref (nk, 1, th) | w2_ref (nk, th, Op)
    # streamed: w1_ref (Dp, th)     | b1_ref (1, th)     | w2_ref (th, Op)
    # b2_ref : (1, Op)   o_ref : (tm, Op)   acc_ref : (tm, Op) f32 scratch.
    k = pl.program_id(1)

    @pl.when(k == 0)
    def _():
        acc_ref[...] = jnp.zeros_like(acc_ref)

    if resident:
        w1 = w1_ref[k]      # (Dp, th)
        b1 = b1_ref[k]      # (1, th)
        w2 = w2_ref[k]      # (th, Op)
    else:
        w1 = w1_ref[...]
        b1 = b1_ref[...]
        w2 = w2_ref[...]

    # fc1 chunk on the MXU, f32 accumulation.
    h = jnp.dot(x_ref[...], w1, preferred_element_type=jnp.float32)
    h = h + b1.astype(jnp.float32)

    # Exact erf-GELU in f32 (matches torch.nn.GELU default, approximate='none').
    # TODO(synk): if a bundle dump shows the erf VPU polynomial becoming the
    # binding slot after the bf16 MXU switch, consider tanh-GELU (EUP slot).
    h = 0.5 * h * (1.0 + lax.erf(h * jnp.float32(0.7071067811865476)))

    # fc2 chunk, accumulated into the resident f32 scratch.
    acc_ref[...] += jnp.dot(h.astype(w2.dtype), w2,
                            preferred_element_type=jnp.float32)

    @pl.when(k == pl.num_programs(1) - 1)
    def _():
        o_ref[...] = (acc_ref[...] + b2_ref[...].astype(jnp.float32)
                      ).astype(o_ref.dtype)


def _vmem_limit_default():
    # Generation-aware: ~96 MiB on v5e/v6e (128 MiB VMEM), ~48 MiB on v7x (64 MiB/TC).
    try:
        cap = int(getattr(pltpu.get_tpu_info(), "vmem_capacity_bytes",
                          64 * 1024 * 1024))
    except Exception:
        cap = 64 * 1024 * 1024  # conservative fallback (v7x per-TC VMEM)
    return min(cap * 3 // 4, 112 * 1024 * 1024)


def mlp_pallas(x, w1, b1, w2, b2, *, compute_dtype=jnp.bfloat16, tm=512, th=1024,
               vmem_limit_bytes=None, weights_resident=None):
    """x: (..., D); w1: (D, H); b1: (H,); w2: (H, O); b2: (O,).

    Weights are stored transposed relative to torch.nn.Linear so the kernel
    does plain row-major matmuls on the MXU.  `compute_dtype` is the MXU
    input dtype (default bf16); accumulation and GELU stay in f32.
    `weights_resident=None` chooses automatically based on the VMEM budget.
    """
    orig_shape = x.shape
    D = orig_shape[-1]
    H = w1.shape[1]
    O = w2.shape[1]
    out_dtype = x.dtype

    x2d = x.reshape(-1, D)
    M = x2d.shape[0]

    if compute_dtype is not None:
        x2d = x2d.astype(compute_dtype)
        w1 = w1.astype(compute_dtype)
        w2 = w2.astype(compute_dtype)
    b1 = b1.astype(jnp.float32)
    b2 = b2.astype(jnp.float32)

    x_sz = x2d.dtype.itemsize
    w_sz = w1.dtype.itemsize
    out_sz = jnp.dtype(out_dtype).itemsize

    if vmem_limit_bytes is None:
        vmem_limit_bytes = _vmem_limit_default()
    vmem_limit_bytes = int(vmem_limit_bytes)
    budget = int(vmem_limit_bytes * 0.9)

    # Lane-dense padding targets (feature dims -> multiples of 128).
    D_pad = _round_up(D, 128)
    O_pad = _round_up(O, 128)
    H128 = _round_up(H, 128)

    # Hidden-dim chunk: balanced number of chunks, multiple of 128.
    th_req = min(_round_up(th, 128), H128)
    n_k_guess = _cdiv(H128, th_req)
    th_eff = _round_up(_cdiv(H128, n_k_guess), 128)

    # Row tile: aligned to sublane packing of the compute dtype; expose >= 2
    # row tiles when possible so the "parallel" axis feeds both v7x TCs.
    row_align = 16 if x_sz < 4 else 8
    tm_eff = min(tm, _round_up(M, row_align))
    if M > row_align and _cdiv(M, tm_eff) < 2:
        tm_eff = _round_up(_cdiv(M, 2), row_align)

    def _stream_bytes(tm_, th_):
        return (2 * tm_ * D_pad * x_sz          # x tile (double buffered)
                + 2 * D_pad * th_ * w_sz        # W1 chunk (double buffered)
                + 2 * th_ * O_pad * w_sz        # W2 chunk (double buffered)
                + 2 * (th_ + O_pad) * 4         # bias chunks
                + 2 * tm_ * O_pad * out_sz      # out tile (double buffered)
                + tm_ * O_pad * 4               # f32 accumulator
                + 2 * tm_ * th_ * 4)            # hidden-chunk f32 temporaries

    def _resident_bytes(tm_, th_):
        h_pad = _round_up(H, th_)
        return (D_pad * h_pad * w_sz            # W1 whole, single copy
                + h_pad * O_pad * w_sz          # W2 whole, single copy
                + (8 * h_pad + 8 * O_pad) * 4   # biases (sublane padded)
                + 2 * tm_ * D_pad * x_sz
                + 2 * tm_ * O_pad * out_sz
                + tm_ * O_pad * 4
                + 2 * tm_ * th_ * 4)

    if weights_resident is None:
        resident = _resident_bytes(tm_eff, th_eff) <= budget
    else:
        resident = bool(weights_resident)

    if not resident:
        # Shrink streamed tiles until the double-buffered working set fits.
        while _stream_bytes(tm_eff, th_eff) > budget and th_eff > 128:
            th_eff = max(128, (th_eff // 2) // 128 * 128)
        while _stream_bytes(tm_eff, th_eff) > budget and tm_eff > 2 * row_align:
            tm_eff = max(row_align, _round_up(tm_eff // 2, row_align))

    H_pad = _round_up(H, th_eff)
    M_pad = _round_up(M, tm_eff)
    n_k = H_pad // th_eff
    n_rows = M_pad // tm_eff

    # Pad (copies skipped when shapes are already aligned).
    xp = _pad_to(x2d, (M_pad, D_pad))
    w1p = _pad_to(w1, (D_pad, H_pad))
    b1p = _pad_to(b1.reshape(1, H), (1, H_pad))
    w2p = _pad_to(w2, (H_pad, O_pad))
    b2p = _pad_to(b2.reshape(1, O), (1, O_pad))

    x_spec = pl.BlockSpec((tm_eff, D_pad), lambda i, k: (i, 0))
    out_spec = pl.BlockSpec((tm_eff, O_pad), lambda i, k: (i, 0))

    if resident:
        # Pre-chunk weights along H so the kernel uses plain leading-axis
        # indexing (ref[k]) on whole-array VMEM refs (DMA'd from HBM once,
        # no per-row-tile re-streaming, no double buffering).
        w1p = w1p.reshape(D_pad, n_k, th_eff).transpose(1, 0, 2)  # (nk, Dp, th)
        b1p = b1p.reshape(n_k, 1, th_eff)                          # (nk, 1,  th)
        w2p = w2p.reshape(n_k, th_eff, O_pad)                      # (nk, th, Op)
        vmem_full = pl.BlockSpec(memory_space=pltpu.MemorySpace.VMEM)
        w_specs = [vmem_full, vmem_full, vmem_full, vmem_full]
    else:
        w_specs = [
            pl.BlockSpec((D_pad, th_eff), lambda i, k: (0, k)),   # W1 H-chunk
            pl.BlockSpec((1, th_eff), lambda i, k: (0, k)),       # b1 H-chunk
            pl.BlockSpec((th_eff, O_pad), lambda i, k: (k, 0)),   # W2 H-chunk
            pl.BlockSpec((1, O_pad), lambda i, k: (0, 0)),        # b2 (resident)
        ]

    w_stream_factor = 1 if resident else n_rows
    cost = pl.CostEstimate(
        flops=int(2 * M_pad * (D_pad * H_pad + H_pad * O_pad)),
        transcendentals=int(M_pad * H_pad),
        bytes_accessed=int(M_pad * D_pad * x_sz
                           + w_stream_factor * (D_pad * H_pad + H_pad * O_pad) * w_sz
                           + (H_pad + O_pad) * 4
                           + M_pad * O_pad * out_sz),
    )

    out2d = pl.pallas_call(
        functools.partial(_mlp_kernel, resident=resident),
        out_shape=jax.ShapeDtypeStruct((M_pad, O_pad), out_dtype),
        grid_spec=pltpu.PrefetchScalarGridSpec(
            num_scalar_prefetch=0,
            grid=(n_rows, n_k),
            in_specs=[x_spec] + w_specs,
            out_specs=out_spec,
            scratch_shapes=[pltpu.VMEM((tm_eff, O_pad), jnp.float32)],
        ),
        compiler_params=pltpu.CompilerParams(
            dimension_semantics=("parallel", "arbitrary"),
            vmem_limit_bytes=vmem_limit_bytes,
        ),
        cost_estimate=cost,
    )(xp, w1p, b1p, w2p, b2p)

    out2d = out2d[:M, :O]
    return out2d.reshape(*orig_shape[:-1], O)


def _torch_linear_init(key, fan_in, fan_out):
    """Deterministic init matching torch.nn.Linear (kaiming-uniform + uniform bias).
    Returns weight already transposed to (fan_in, fan_out)."""
    kw, kb = jax.random.split(key)
    bound = 1.0 / math.sqrt(fan_in)
    w = jax.random.uniform(kw, (fan_in, fan_out), jnp.float32,
                           minval=-bound, maxval=bound)
    b = jax.random.uniform(kb, (fan_out,), jnp.float32,
                           minval=-bound, maxval=bound)
    return w, b


def mlp_reference(x, w1, b1, w2, b2):
    h = jnp.dot(x, w1, precision=lax.Precision.HIGHEST) + b1
    h = 0.5 * h * (1.0 + lax.erf(h / jnp.sqrt(jnp.float32(2.0))))
    return jnp.dot(h, w2, precision=lax.Precision.HIGHEST) + b2


if __name__ == "__main__":
    key = jax.random.PRNGKey(0)
    k_x, k_fc1, k_fc2 = jax.random.split(key, 3)

    batch, seq = 2, 8
    in_features = 32
    hidden_features = 64
    out_features = 32  # Mlp defaults out_features to in_features

    x = jax.random.normal(k_x, (batch, seq, in_features), jnp.float32)
    w1, b1 = _torch_linear_init(k_fc1, in_features, hidden_features)
    w2, b2 = _torch_linear_init(k_fc2, hidden_features, out_features)

    ref = mlp_reference(x, w1, b1, w2, b2)

    # Default path: bf16 MXU inputs, weight-resident fast path, f32 output.
    out = jax.block_until_ready(mlp_pallas(x, w1, b1, w2, b2))
    assert out.shape == (batch, seq, out_features)
    assert out.dtype == x.dtype
    assert jnp.allclose(out, ref, atol=3e-2, rtol=3e-2), "bf16 resident mismatch"

    # f32 MXU inputs, weight-resident path (tight-tolerance correctness check).
    out_f32 = jax.block_until_ready(
        mlp_pallas(x, w1, b1, w2, b2, compute_dtype=None))
    assert jnp.allclose(out_f32, ref, atol=1e-4, rtol=1e-4), "f32 resident mismatch"

    # f32 MXU inputs, forced weight-streaming path (exercises the H-chunk pipeline).
    out_stream = jax.block_until_ready(
        mlp_pallas(x, w1, b1, w2, b2, compute_dtype=None, weights_resident=False))
    assert jnp.allclose(out_stream, ref, atol=1e-4, rtol=1e-4), "f32 streamed mismatch"

    print("KERNEL_OK")
</pallas_src>

<mosaic_0001>
module attributes {stable_mosaic.version = 11 : i64} {
  func.func @_mlp_kernel(%arg0: i32, %arg1: i32, %arg2: memref<16x128xbf16, #tpu.memory_space<vmem>>, %arg3: memref<1x128x128xbf16, #tpu.memory_space<vmem>>, %arg4: memref<1x1x128xf32, #tpu.memory_space<vmem>>, %arg5: memref<1x128x128xbf16, #tpu.memory_space<vmem>>, %arg6: memref<1x128xf32, #tpu.memory_space<vmem>>, %arg7: memref<16x128xf32, #tpu.memory_space<vmem>>, %arg8: memref<16x128xf32, #tpu.memory_space<vmem>>) attributes {dimension_semantics = [#tpu.dimension_semantics<parallel>, #tpu.dimension_semantics<arbitrary>], iteration_bounds = array<i64: 1, 1>, scalar_prefetch = 0 : i64, scratch_operands = 1 : i64, tpu.core_type = #tpu.core_type<tc>, window_params = [{transform_indices = @transform_0, window_bounds = array<i64: 16, 128>}, {pipeline_mode = #tpu.pipeline_mode<synchronous>, transform_indices = @transform_1, window_bounds = array<i64: 1, 128, 128>}, {pipeline_mode = #tpu.pipeline_mode<synchronous>, transform_indices = @transform_2, window_bounds = array<i64: 1, 1, 128>}, {pipeline_mode = #tpu.pipeline_mode<synchronous>, transform_indices = @transform_3, window_bounds = array<i64: 1, 128, 128>}, {pipeline_mode = #tpu.pipeline_mode<synchronous>, transform_indices = @transform_4, window_bounds = array<i64: 1, 128>}, {transform_indices = @transform_5, window_bounds = array<i64: 16, 128>}]} {
    %c0_i32 = arith.constant 0 : i32
    %0 = arith.cmpi eq, %arg1, %c0_i32 : i32
    %1 = arith.extui %0 : i1 to i32
    %c0_i32_0 = arith.constant 0 : i32
    %2 = arith.cmpi ne, %1, %c0_i32_0 : i32
    scf.if %2 {
      %cst_18 = arith.constant 0.000000e+00 : f32
      %32 = vector.broadcast %cst_18 : f32 to vector<16x128xf32>
      %c0_19 = arith.constant 0 : index
      %c0_20 = arith.constant 0 : index
      %33 = vector.load %arg8[%c0_19, %c0_20] : memref<16x128xf32, #tpu.memory_space<vmem>>, vector<16x128xf32>
      tpu.vector_store %arg8[%c0_19, %c0_20], %32 {strides = array<i32>} : memref<16x128xf32, #tpu.memory_space<vmem>>, vector<16x128xf32>,
    } else {
    }
    %3 = arith.index_cast %arg1 : i32 to index
    %c0 = arith.constant 0 : index
    %c0_1 = arith.constant 0 : index
    %4 = vector.load %arg3[%3, %c0, %c0_1] : memref<1x128x128xbf16, #tpu.memory_space<vmem>>, vector<1x128x128xbf16>
    %5 = vector.shape_cast %4 : vector<1x128x128xbf16> to vector<128x128xbf16>
    %6 = arith.index_cast %arg1 : i32 to index
    %c0_2 = arith.constant 0 : index
    %c0_3 = arith.constant 0 : index
    %7 = vector.load %arg4[%6, %c0_2, %c0_3] : memref<1x1x128xf32, #tpu.memory_space<vmem>>, vector<1x1x128xf32>
    %8 = vector.shape_cast %7 : vector<1x1x128xf32> to vector<1x128xf32>
    %9 = arith.index_cast %arg1 : i32 to index
    %c0_4 = arith.constant 0 : index
    %c0_5 = arith.constant 0 : index
    %10 = vector.load %arg5[%9, %c0_4, %c0_5] : memref<1x128x128xbf16, #tpu.memory_space<vmem>>, vector<1x128x128xbf16>
    %11 = vector.shape_cast %10 : vector<1x128x128xbf16> to vector<128x128xbf16>
    %c0_6 = arith.constant 0 : index
    %c0_7 = arith.constant 0 : index
    %12 = vector.load %arg2[%c0_6, %c0_7] : memref<16x128xbf16, #tpu.memory_space<vmem>>, vector<16x128xbf16>
    %cst = arith.constant dense<0.000000e+00> : vector<16x128xf32>
    %13 = tpu.matmul %12, %5, %cst {dimension_numbers = #tpu.dot_dimension_numbers<[1], [0], [0], [1], [0, 0, 1, 1], [], []>} : vector<16x128xbf16>, vector<128x128xbf16>, vector<16x128xf32> -> vector<16x128xf32>
    %14 = vector.broadcast %8 : vector<1x128xf32> to vector<16x128xf32>
    %15 = arith.addf %13, %14 : vector<16x128xf32>
    %cst_8 = arith.constant 5.000000e-01 : f32
    %16 = vector.broadcast %cst_8 : f32 to vector<16x128xf32>
    %17 = arith.mulf %16, %15 : vector<16x128xf32>
    %cst_9 = arith.constant 0.707106769 : f32
    %18 = vector.broadcast %cst_9 : f32 to vector<16x128xf32>
    %19 = arith.mulf %15, %18 : vector<16x128xf32>
    %20 = math.erf %19 : vector<16x128xf32>
    %cst_10 = arith.constant 1.000000e+00 : f32
    %21 = vector.broadcast %cst_10 : f32 to vector<16x128xf32>
    %22 = arith.addf %21, %20 : vector<16x128xf32>
    %23 = arith.mulf %17, %22 : vector<16x128xf32>
    %c0_11 = arith.constant 0 : index
    %c0_12 = arith.constant 0 : index
    %24 = vector.load %arg8[%c0_11, %c0_12] : memref<16x128xf32, #tpu.memory_space<vmem>>, vector<16x128xf32>
    %25 = arith.truncf %23 : vector<16x128xf32> to vector<16x128xbf16>
    %cst_13 = arith.constant dense<0.000000e+00> : vector<16x128xf32>
    %26 = tpu.matmul %25, %11, %cst_13 {dimension_numbers = #tpu.dot_dimension_numbers<[1], [0], [0], [1], [0, 0, 1, 1], [], []>} : vector<16x128xbf16>, vector<128x128xbf16>, vector<16x128xf32> -> vector<16x128xf32>
    %27 = arith.addf %24, %26 : vector<16x128xf32>
    %c0_14 = arith.constant 0 : index
    %c0_15 = arith.constant 0 : index
    %28 = vector.load %arg8[%c0_14, %c0_15] : memref<16x128xf32, #tpu.memory_space<vmem>>, vector<16x128xf32>
    tpu.vector_store %arg8[%c0_14, %c0_15], %27 {strides = array<i32>} : memref<16x128xf32, #tpu.memory_space<vmem>>, vector<16x128xf32>,
    %c0_i32_16 = arith.constant 0 : i32
    %29 = arith.cmpi eq, %arg1, %c0_i32_16 : i32
    %30 = arith.extui %29 : i1 to i32
    %c0_i32_17 = arith.constant 0 : i32
    %31 = arith.cmpi ne, %30, %c0_i32_17 : i32
    scf.if %31 {
      %c0_18 = arith.constant 0 : index
      %c0_19 = arith.constant 0 : index
      %32 = vector.load %arg8[%c0_18, %c0_19] : memref<16x128xf32, #tpu.memory_space<vmem>>, vector<16x128xf32>
      %c0_20 = arith.constant 0 : index
      %c0_21 = arith.constant 0 : index
      %33 = vector.load %arg6[%c0_20, %c0_21] : memref<1x128xf32, #tpu.memory_space<vmem>>, vector<1x128xf32>
      %34 = vector.broadcast %33 : vector<1x128xf32> to vector<16x128xf32>
      %35 = arith.addf %32, %34 : vector<16x128xf32>
      %c0_22 = arith.constant 0 : index
      %c0_23 = arith.constant 0 : index
      %36 = vector.load %arg7[%c0_22, %c0_23] : memref<16x128xf32, #tpu.memory_space<vmem>>, vector<16x128xf32>
      tpu.vector_store %arg7[%c0_22, %c0_23], %35 {strides = array<i32>} : memref<16x128xf32, #tpu.memory_space<vmem>>, vector<16x128xf32>,
    } else {
    }
    return
  }
  func.func @transform_0(%arg0: i32, %arg1: i32) -> (i32, i32) {
    %c0_i32 = arith.constant 0 : i32
    %c0_i32_0 = arith.constant 0 : i32
    return %arg0, %c0_i32 : i32, i32
  }
  func.func @transform_1(%arg0: i32, %arg1: i32) -> (i32, i32, i32) {
    %c0_i32 = arith.constant 0 : i32
    %c0_i32_0 = arith.constant 0 : i32
    %c0_i32_1 = arith.constant 0 : i32
    %c0_i32_2 = arith.constant 0 : i32
    return %c0_i32, %c0_i32_0, %c0_i32_1 : i32, i32, i32
  }
  func.func @transform_2(%arg0: i32, %arg1: i32) -> (i32, i32, i32) {
    %c0_i32 = arith.constant 0 : i32
    %c0_i32_0 = arith.constant 0 : i32
    %c0_i32_1 = arith.constant 0 : i32
    %c0_i32_2 = arith.constant 0 : i32
    return %c0_i32, %c0_i32_0, %c0_i32_1 : i32, i32, i32
  }
  func.func @transform_3(%arg0: i32, %arg1: i32) -> (i32, i32, i32) {
    %c0_i32 = arith.constant 0 : i32
    %c0_i32_0 = arith.constant 0 : i32
    %c0_i32_1 = arith.constant 0 : i32
    %c0_i32_2 = arith.constant 0 : i32
    return %c0_i32, %c0_i32_0, %c0_i32_1 : i32, i32, i32
  }
  func.func @transform_4(%arg0: i32, %arg1: i32) -> (i32, i32) {
    %c0_i32 = arith.constant 0 : i32
    %c0_i32_0 = arith.constant 0 : i32
    %c0_i32_1 = arith.constant 0 : i32
    return %c0_i32, %c0_i32_0 : i32, i32
  }
  func.func @transform_5(%arg0: i32, %arg1: i32) -> (i32, i32) {
    %c0_i32 = arith.constant 0 : i32
    %c0_i32_0 = arith.constant 0 : i32
    return %arg0, %c0_i32 : i32, i32
  }
}

</mosaic_0001>

<llo_original>
// kernel: tpu_custom_call.1
$region0: #{tpu_custom_call.1}
  #allocation0 [shape = 'u32[]', space=smem, size = 0x4, offset = 0x4, fixed_abs, tag = 'smem constant byte address 0x4 - core index']
  #allocation1 [shape = 'u32[72,128]{1,0:T(1,128)}', space=vmem, size = 0x9000, scoped, tag = 'internal scratch']
  #allocation2 [shape = 'f32[16,128]{1,0:T(8,128)}', space=vmem, size = 0x2000, scoped, tag = 'scratch operand']
  %s0 = inlined_call_operand.hbm [shape: bf16[16,128], index: 0, kind: input, shape index: {}]
  %s1 = inlined_call_operand.hbm [shape: bf16[1,128,128], index: 1, kind: input, shape index: {}]
  %s2 = inlined_call_operand.vmem [shape: f32[1,1,128], index: 2, kind: input, shape index: {}]
  %s3 = inlined_call_operand.hbm [shape: bf16[1,128,128], index: 3, kind: input, shape index: {}]
  %s4 = inlined_call_operand.vmem [shape: f32[1,128], index: 4, kind: input, shape index: {}]
  %s5 = inlined_call_operand.hbm [shape: f32[16,128], index: 5, kind: output, shape index: {}]
  %s6 = sld [smem:[#allocation0]]
  $region50: #{tpu_custom_call.1} parent=0
    _
  %s8 = ssub.s32 1, %s6
  %s9 = scalar_select 0, %s8, %s6
  $region1: #{tpu_custom_call.1} parent=0
    #allocation3 [shape = 'u8[4096]{0}', space=vmem, size = 0x1000, scoped, tag = 'input window, operand 0, single buffered']
    #allocation4 [shape = 's32[1]{0}', space=sflag, size = 0x4, scoped, tag = 'scoped memory for tpu_custom_call.1']
    #allocation5 [shape = 's32[1]{0}', space=sflag, size = 0x4, scoped, tag = 'scoped memory for tpu_custom_call.1']
    #allocation6 [shape = 'u8[32768]{0}', space=vmem, size = 0x8000, scoped, tag = 'input window, operand 1, single buffered']
    #allocation7 [shape = 's32[1]{0}', space=sflag, size = 0x4, scoped, tag = 'scoped memory for tpu_custom_call.1']
    #allocation8 [shape = 'u8[32768]{0}', space=vmem, size = 0x8000, scoped, tag = 'input window, operand 3, single buffered']
    #allocation9 [shape = 'u8[8192]{0}', space=vmem, size = 0x2000, scoped, tag = 'output window, operand 0, single buffered']
    %10 = vsyncpa [#allocation4], 0
    %11 = vsyncpa [#allocation7], 0
    %12 = vsyncpa [#allocation5], 0
    // Predicated region
    $region2: #{tpu_custom_call.1} parent=1 // pred_check
      _
    $region3: #{tpu_custom_call.1} parent=1 // pred_check_branch
      %14 = sbr.rel (0) target = $region5
    $region4: #{tpu_custom_call.1} parent=1 // pred_region
      %16 = vsyncadd [#allocation4], 0
      %s17 = sshll.u32 %s0, 4
      %s18 = int_to_ptr.hbm [resolvable:$true] %s17
      %s19 = sshll.u32 [#allocation3], 4
      %s20 = int_to_ptr.vmem [resolvable:$true] %s19
      %25 = dma.hbm_to_vmem [thread:$0]  %s18, 128, %s20, [#allocation4], 64, 64, 4
    $region5: #{tpu_custom_call.1} parent=1 // pred_fallthru
      _
    // Predicated region
    $region6: #{tpu_custom_call.1} parent=1 // pred_check
      _
    $region7: #{tpu_custom_call.1} parent=1 // pred_check_branch
      %27 = sbr.rel (0) target = $region9
    $region8: #{tpu_custom_call.1} parent=1 // pred_region
      %29 = vsyncadd [#allocation7], 0
      %s30 = sshll.u32 %s1, 4
      %s31 = int_to_ptr.hbm [resolvable:$true] %s30
      %s32 = sshll.u32 [#allocation6], 4
      %s33 = int_to_ptr.vmem [resolvable:$true] %s32
      %38 = dma.hbm_to_vmem [thread:$0]  %s31, 1024, %s33, [#allocation7], 64, 64, 4
    $region9: #{tpu_custom_call.1} parent=1 // pred_fallthru
      _
    // Predicated region
    $region10: #{tpu_custom_call.1} parent=1 // pred_check
      _
    $region11: #{tpu_custom_call.1} parent=1 // pred_check_branch
      %40 = sbr.rel (0) target = $region13
    $region12: #{tpu_custom_call.1} parent=1 // pred_region
      _
    $region13: #{tpu_custom_call.1} parent=1 // pred_fallthru
      _
    // Predicated region
    $region14: #{tpu_custom_call.1} parent=1 // pred_check
      _
    $region15: #{tpu_custom_call.1} parent=1 // pred_check_branch
      %42 = sbr.rel (0) target = $region17
    $region16: #{tpu_custom_call.1} parent=1 // pred_region
      %44 = vsyncadd [#allocation7], 0
      %s45 = sshll.u32 %s3, 4
      %s46 = int_to_ptr.hbm [resolvable:$true] %s45
      %s47 = sshll.u32 [#allocation8], 4
      %s48 = int_to_ptr.vmem [resolvable:$true] %s47
      %53 = dma.hbm_to_vmem [thread:$0]  %s46, 1024, %s48, [#allocation7], 64, 64, 4
    $region17: #{tpu_custom_call.1} parent=1 // pred_fallthru
      _
    // Predicated region
    $region18: #{tpu_custom_call.1} parent=1 // pred_check
      _
    $region19: #{tpu_custom_call.1} parent=1 // pred_check_branch
      %55 = sbr.rel (0) target = $region21
    $region20: #{tpu_custom_call.1} parent=1 // pred_region
      _
    $region21: #{tpu_custom_call.1} parent=1 // pred_fallthru
      _
    // Predicated region
    $region22: #{tpu_custom_call.1} parent=1 // pred_check
      _
    $region23: #{tpu_custom_call.1} parent=1 // pred_check_branch
      %57 = sbr.rel (0) target = $region25
    $region24: #{tpu_custom_call.1} parent=1 // pred_region
      %59 = dma.done [#allocation4], 128
    $region25: #{tpu_custom_call.1} parent=1 // pred_fallthru
      _
    // Predicated region
    $region26: #{tpu_custom_call.1} parent=1 // pred_check
      _
    $region27: #{tpu_custom_call.1} parent=1 // pred_check_branch
      %61 = sbr.rel (0) target = $region29
    $region28: #{tpu_custom_call.1} parent=1 // pred_region
      %63 = dma.done [#allocation7], 1024
    $region29: #{tpu_custom_call.1} parent=1 // pred_fallthru
      _
    // Predicated region
    $region30: #{tpu_custom_call.1} parent=1 // pred_check
      _
    $region31: #{tpu_custom_call.1} parent=1 // pred_check_branch
      %65 = sbr.rel (0) target = $region33
    $region32: #{tpu_custom_call.1} parent=1 // pred_region
      %67 = dma.done [#allocation7], 1024
    $region33: #{tpu_custom_call.1} parent=1 // pred_fallthru
      _
    %p68 = scmp.eq.s32.totalorder 0, 0
    // Predicated region
    $region34: #{tpu_custom_call.1} parent=1 // pred_check
      %p69 = pneg %p68
    $region35: #{tpu_custom_call.1} parent=1 // pred_check_branch
      %71 = sbr.rel (%p69) target = $region37
    $region36: #{tpu_custom_call.1} parent=1 // pred_region
      %72 = vst [vmem:[#allocation2] sm:$0xff] 0.0
      %73 = vst [vmem:[#allocation2 + $0x8] sm:$0xff] 0.0
    $region37: #{tpu_custom_call.1} parent=1 // pred_fallthru
      _
    %s74 = smul.u32 0, 16
    %s75 = smul.addr %s74, 4
    %s76 = scalar_lea.vmem [#allocation6], %s75
    %v77 = vld [vmem:[%s76] sm:$0xf]
    %v78 = vld [vmem:[%s76 + $0x4] sm:$0xf]
    %v79 = vld [vmem:[%s76 + $0x8] sm:$0xf]
    %v80 = vld [vmem:[%s76 + $0xc] sm:$0xf]
    %v81 = vld [vmem:[%s76 + $0x10] sm:$0xf]
    %v82 = vld [vmem:[%s76 + $0x14] sm:$0xf]
    %v83 = vld [vmem:[%s76 + $0x18] sm:$0xf]
    %v84 = vld [vmem:[%s76 + $0x1c] sm:$0xf]
    %v85 = vld [vmem:[%s76 + $0x20] sm:$0xf]
    %v86 = vld [vmem:[%s76 + $0x24] sm:$0xf]
    %v87 = vld [vmem:[%s76 + $0x28] sm:$0xf]
    %v88 = vld [vmem:[%s76 + $0x2c] sm:$0xf]
    %v89 = vld [vmem:[%s76 + $0x30] sm:$0xf]
    %v90 = vld [vmem:[%s76 + $0x34] sm:$0xf]
    %v91 = vld [vmem:[%s76 + $0x38] sm:$0xf]
    %v92 = vld [vmem:[%s76 + $0x3c] sm:$0xf]
    %v93 = vld [vmem:[%s2] sm:$0x1]
    %s94 = smul.addr %s74, 4
    %s95 = scalar_lea.vmem [#allocation8], %s94
    %v96 = vld [vmem:[%s95] sm:$0xf]
    %v97 = vld [vmem:[%s95 + $0x4] sm:$0xf]
    %v98 = vld [vmem:[%s95 + $0x8] sm:$0xf]
    %v99 = vld [vmem:[%s95 + $0xc] sm:$0xf]
    %v100 = vld [vmem:[%s95 + $0x10] sm:$0xf]
    %v101 = vld [vmem:[%s95 + $0x14] sm:$0xf]
    %v102 = vld [vmem:[%s95 + $0x18] sm:$0xf]
    %v103 = vld [vmem:[%s95 + $0x1c] sm:$0xf]
    %v104 = vld [vmem:[%s95 + $0x20] sm:$0xf]
    %v105 = vld [vmem:[%s95 + $0x24] sm:$0xf]
    %v106 = vld [vmem:[%s95 + $0x28] sm:$0xf]
    %v107 = vld [vmem:[%s95 + $0x2c] sm:$0xf]
    %v108 = vld [vmem:[%s95 + $0x30] sm:$0xf]
    %v109 = vld [vmem:[%s95 + $0x34] sm:$0xf]
    %v110 = vld [vmem:[%s95 + $0x38] sm:$0xf]
    %v111 = vld [vmem:[%s95 + $0x3c] sm:$0xf]
    %v112 = vld [vmem:[#allocation3] sm:$0xf]
    %v113 = vld [vmem:[#allocation3 + $0x4] sm:$0xf]
    %v115 = vperm.slane %v93, 0
    %v119 = vunpack.c.l.b16 %v112
    %v120 = vunpack.c.l.b16 %v113
    %v121 = vpack.c.b16 %v120, %v119
    %v139 = vunpack.c.l.b16 %v77
    %v140 = vunpack.c.l.b16 %v78
    %v141 = vunpack.c.l.b16 %v79
    %v142 = vunpack.c.l.b16 %v80
    %v143 = vunpack.c.l.b16 %v81
    %v144 = vunpack.c.l.b16 %v82
    %v145 = vunpack.c.l.b16 %v83
    %v146 = vunpack.c.l.b16 %v84
    %v147 = vunpack.c.l.b16 %v85
    %v148 = vunpack.c.l.b16 %v86
    %v149 = vunpack.c.l.b16 %v87
    %v150 = vunpack.c.l.b16 %v88
    %v151 = vunpack.c.l.b16 %v89
    %v152 = vunpack.c.l.b16 %v90
    %v153 = vunpack.c.l.b16 %v91
    %v154 = vunpack.c.l.b16 %v92
    %v155 = vpack.c.b16 %v140, %v139
    %v156 = vpack.c.b16 %v142, %v141
    %v157 = vpack.c.b16 %v144, %v143
    %v158 = vpack.c.b16 %v146, %v145
    %v159 = vpack.c.b16 %v148, %v147
    %v160 = vpack.c.b16 %v150, %v149
    %v161 = vpack.c.b16 %v152, %v151
    %v162 = vpack.c.b16 %v154, %v153
    %171 = vmatpush.bf16.msra.mxu0 %v162
    %172 = vmatpush.bf16.msra.mxu0 %v161
    %173 = vmatpush.bf16.msra.mxu0 %v160
    %174 = vmatpush.bf16.msra.mxu0 %v159
    %175 = vmatpush.bf16.msra.mxu0 %v158
    %176 = vmatpush.bf16.msra.mxu0 %v157
    %177 = vmatpush.bf16.msra.mxu0 %v156
    %178 = vmatpush.bf16.msra.mxu0 %v155
    %179 = vmatmul.bf16.gmra.mxu0 %v121
    %v180 = vpop.f32.mrf.mxu0
    %v181 = vadd.f32 %v115, %v180
    %v182 = vpop.f32.mrf.mxu0
    %v183 = vadd.f32 %v115, %v182
    %184 = vdwg.mxu0
    %v185 = vmul.f32 %v181, 0.5
    %v186 = vmul.f32 %v183, 0.5
    %v187 = vmul.f32 %v181, 0.70710677
    %v188 = vmul.f32 %v183, 0.70710677
    %v189 = vmul.f32 %v187, %v187
    %v190 = vmin.f32 16.0, %v189
    %v191 = vmul.f32 %v190, 2.1237322e-06
    %v192 = vadd.f32 %v191, 0.00028619796
    %v193 = vmul.f32 %v190, %v192
    %v194 = vadd.f32 %v193, 0.0036580483
    %v195 = vmul.f32 %v190, %v194
    %v196 = vadd.f32 %v195, 0.05243302
    %v197 = vmul.f32 %v190, %v196
    %v198 = vadd.f32 %v197, 0.18741608
    %v199 = vmul.f32 %v190, %v198
    %v200 = vadd.f32 %v199, 1.1283791
    %v201 = vmul.f32 %v187, %v200
    %v202 = vmul.f32 %v190, 3.8918573e-05
    %v203 = vadd.f32 %v202, 0.001143296
    %v204 = vmul.f32 %v190, %v203
    %v205 = vadd.f32 %v204, 0.014752088
    %v206 = vmul.f32 %v190, %v205
    %v207 = vadd.f32 %v206, 0.112945676
    %v208 = vmul.f32 %v190, %v207
    %v209 = vadd.f32 %v208, 0.4994258
    %v210 = vmul.f32 %v190, %v209
    %v211 = vadd.f32 %v210, 1.0
    %v212 = vrcp.pop %v211
    %v213 = vmul.f32 %v211, %v212
    %v214 = vsub.f32 1.0, %v213
    %v215 = vmul.f32 %v212, %v214
    %v216 = vadd.f32 %v212, %v215
    %vm217 = vweird.f32 %v211
    %vm218 = vweird.f32 %v212
    %vm219 = vmor %vm217, %vm218
    %v220 = vsel %vm219, %v212, %v216
    %v221 = vand.u32 2147483647, %v211
    %vm222 = vcmp.eq.f32.partialorder %v221, 8.507059e+37
    %v223 = vand.u32 %v211, 2147483648
    %v224 = vor.u32 1.1754944e-38, %v223
    %v225 = vsel %vm222, %v224, %v220
    %v226 = vmul.f32 %v201, %v225
    %v227 = vmin.f32 %v226, 1.0
    %v228 = vmax.f32 %v227, -1.0
    %v229 = vmul.f32 %v188, %v188
    %v230 = vmin.f32 16.0, %v229
    %v231 = vmul.f32 %v230, 2.1237322e-06
    %v232 = vadd.f32 %v231, 0.00028619796
    %v233 = vmul.f32 %v230, %v232
    %v234 = vadd.f32 %v233, 0.0036580483
    %v235 = vmul.f32 %v230, %v234
    %v236 = vadd.f32 %v235, 0.05243302
    %v237 = vmul.f32 %v230, %v236
    %v238 = vadd.f32 %v237, 0.18741608
    %v239 = vmul.f32 %v230, %v238
    %v240 = vadd.f32 %v239, 1.1283791
    %v241 = vmul.f32 %v188, %v240
    %v242 = vmul.f32 %v230, 3.8918573e-05
    %v243 = vadd.f32 %v242, 0.001143296
    %v244 = vmul.f32 %v230, %v243
    %v245 = vadd.f32 %v244, 0.014752088
    %v246 = vmul.f32 %v230, %v245
    %v247 = vadd.f32 %v246, 0.112945676
    %v248 = vmul.f32 %v230, %v247
    %v249 = vadd.f32 %v248, 0.4994258
    %v250 = vmul.f32 %v230, %v249
    %v251 = vadd.f32 %v250, 1.0
    %v252 = vrcp.pop %v251
    %v253 = vmul.f32 %v251, %v252
    %v254 = vsub.f32 1.0, %v253
    %v255 = vmul.f32 %v252, %v254
    %v256 = vadd.f32 %v252, %v255
    %vm257 = vweird.f32 %v251
    %vm258 = vweird.f32 %v252
    %vm259 = vmor %vm257, %vm258
    %v260 = vsel %vm259, %v252, %v256
    %v261 = vand.u32 2147483647, %v251
    %vm262 = vcmp.eq.f32.partialorder %v261, 8.507059e+37
    %v263 = vand.u32 %v251, 2147483648
    %v264 = vor.u32 1.1754944e-38, %v263
    %v265 = vsel %vm262, %v264, %v260
    %v266 = vmul.f32 %v241, %v265
    %v267 = vmin.f32 %v266, 1.0
    %v268 = vmax.f32 %v267, -1.0
    %v269 = vadd.f32 %v228, 1.0
    %v270 = vadd.f32 %v268, 1.0
    %v271 = vmul.f32 %v185, %v269
    %v272 = vmul.f32 %v186, %v270
    %v273 = vld [vmem:[#allocation2] sm:$0xff]
    %v274 = vld [vmem:[#allocation2 + $0x8] sm:$0xff]
    %v275 = vpack.c.bf16 %v272, %v271
    %v292 = vunpack.c.l.b16 %v96
    %v293 = vunpack.c.l.b16 %v97
    %v294 = vunpack.c.l.b16 %v98
    %v295 = vunpack.c.l.b16 %v99
    %v296 = vunpack.c.l.b16 %v100
    %v297 = vunpack.c.l.b16 %v101
    %v298 = vunpack.c.l.b16 %v102
    %v299 = vunpack.c.l.b16 %v103
    %v300 = vunpack.c.l.b16 %v104
    %v301 = vunpack.c.l.b16 %v105
    %v302 = vunpack.c.l.b16 %v106
    %v303 = vunpack.c.l.b16 %v107
    %v304 = vunpack.c.l.b16 %v108
    %v305 = vunpack.c.l.b16 %v109
    %v306 = vunpack.c.l.b16 %v110
    %v307 = vunpack.c.l.b16 %v111
    %v308 = vpack.c.b16 %v293, %v292
    %v309 = vpack.c.b16 %v295, %v294
    %v310 = vpack.c.b16 %v297, %v296
    %v311 = vpack.c.b16 %v299, %v298
    %v312 = vpack.c.b16 %v301, %v300
    %v313 = vpack.c.b16 %v303, %v302
    %v314 = vpack.c.b16 %v305, %v304
    %v315 = vpack.c.b16 %v307, %v306
    %324 = vmatpush.bf16.msra.mxu0 %v315
    %325 = vmatpush.bf16.msra.mxu0 %v314
    %326 = vmatpush.bf16.msra.mxu0 %v313
    %327 = vmatpush.bf16.msra.mxu0 %v312
    %328 = vmatpush.bf16.msra.mxu0 %v311
    %329 = vmatpush.bf16.msra.mxu0 %v310
    %330 = vmatpush.bf16.msra.mxu0 %v309
    %331 = vmatpush.bf16.msra.mxu0 %v308
    %332 = vmatmul.bf16.gmra.mxu0 %v275
    %v333 = vpop.f32.mrf.mxu0
    %v334 = vadd.f32 0.0, %v333
    %v335 = vpop.f32.mrf.mxu0
    %v336 = vadd.f32 0.0, %v335
    %337 = vdwg.mxu0
    %v338 = vadd.f32 %v273, %v334
    %v339 = vadd.f32 %v274, %v336
    %340 = vst [vmem:[#allocation2] sm:$0xff] %v338
    %341 = vst [vmem:[#allocation2 + $0x8] sm:$0xff] %v339
    // Predicated region
    $region38: #{tpu_custom_call.1} parent=1 // pred_check
      %p342 = pneg %p68
    $region39: #{tpu_custom_call.1} parent=1 // pred_check_branch
      %344 = sbr.rel (%p342) target = $region41
    $region40: #{tpu_custom_call.1} parent=1 // pred_region
      %v345 = vld [vmem:[#allocation2] sm:$0xff]
      %v346 = vld [vmem:[#allocation2 + $0x8] sm:$0xff]
      %v347 = vld [vmem:[%s4] sm:$0x1]
      %v349 = vperm.slane %v347, 0
      %v351 = vadd.f32 %v345, %v349
      %v352 = vadd.f32 %v346, %v349
      %353 = vst [vmem:[#allocation9] sm:$0xff] %v351
      %354 = vst [vmem:[#allocation9 + $0x8] sm:$0xff] %v352
    $region41: #{tpu_custom_call.1} parent=1 // pred_fallthru
      _
    // Predicated region
    $region42: #{tpu_custom_call.1} parent=1 // pred_check
      _
    $region43: #{tpu_custom_call.1} parent=1 // pred_check_branch
      %356 = sbr.rel (0) target = $region45
    $region44: #{tpu_custom_call.1} parent=1 // pred_region
      %358 = vsyncadd [#allocation5], 0
      %s359 = sshll.u32 [#allocation9], 4
      %s360 = int_to_ptr.vmem [resolvable:$true] %s359
      %s361 = sshll.u32 %s5, 4
      %s362 = int_to_ptr.hbm [resolvable:$true] %s361
      %367 = dma.vmem_to_hbm [thread:$0]  %s360, 256, %s362, [#allocation5], 128, 128, 8
    $region45: #{tpu_custom_call.1} parent=1 // pred_fallthru
      _
    // Predicated region
    $region46: #{tpu_custom_call.1} parent=1 // pred_check
      _
    $region47: #{tpu_custom_call.1} parent=1 // pred_check_branch
      %369 = sbr.rel (0) target = $region49
    $region48: #{tpu_custom_call.1} parent=1 // pred_region
      %371 = dma.done [#allocation5], 256
    $region49: #{tpu_custom_call.1} parent=1 // pred_fallthru
      _
    %372 = vsyncpa [#allocation4], 1
    %373 = vsyncpa [#allocation7], 1
    %374 = vsyncpa [#allocation5], 1

</llo_original>
